<compile_context>
chip_gen: v7x
topology: tpu7x:2x2x1
jax: 0.10.0
libtpu: 0.0.40
codegen_flags: <defaults>
</compile_context>

<pallas_src>
import functools
import math

import jax
import jax.numpy as jnp
from jax.experimental import pallas as pl
from jax.experimental.pallas import tpu as pltpu


def _round_up(x, m):
    return (x + m - 1) // m * m


def _cdiv(a, b):
    return (a + b - 1) // b


# -----------------------------------------------------------------------------
# ScalarReadoutLayer: node-tiled MXU matmul on the (zero-padded) weight with
# e3nn 1/sqrt(C) path normalization.
# -----------------------------------------------------------------------------
def _scalar_readout_kernel(x_ref, w_ref, o_ref, *, scale):
    # x_ref: (TN, D) features (bf16/f32), w_ref: (D, O) zero-padded weight,
    # o_ref: (TN, O) f32.  f32 accumulation on the MXU.
    acc = jnp.dot(x_ref[...], w_ref[...], preferred_element_type=jnp.float32)
    o_ref[...] = (acc * scale).astype(o_ref.dtype)


def scalar_readout(node_feats, weight, num_scalars, *, node_tile=8192):
    """o3.Linear(hidden_irreps -> f"{O}x0e") forward.

    node_feats: (N, D) flattened irreps features; 0e block = leading columns
                (holds for MACE/equitriton-style sorted irreps).  Passed to
                the kernel untouched (bf16 recommended).
    weight:     (num_scalars, O) e3nn Linear weight.
    returns:    (N, O) float32.
    """
    # TODO(synk): for O(1e2-1e3)-node graphs this readout should be fused as an
    # epilogue into the kernel that produces node_feats (or left to XLA); a
    # standalone pallas_call is dispatch/DMA-overhead dominated at that size.
    n, d = node_feats.shape
    c, out_dim = weight.shape
    assert c == num_scalars <= d, "0e channels must be the leading columns"

    # Zero-pad the tiny weight to (D, O) so the kernel reads full-width blocks
    # and does a single plain dot: non-scalar feature columns hit zero rows.
    w = weight.astype(node_feats.dtype)
    if c < d:
        w = jnp.pad(w, ((0, d - c), (0, 0)))

    # Tile selection: big tiles (few ~0.35us grid steps), but keep >= 2 grid
    # steps so both v7x TensorCores get work; multiples of 16 cover bf16
    # sublane packing.  N itself is never padded.
    if n <= 16:
        tile = n                                       # single full-extent block
    else:
        tile = min(node_tile, _round_up(_cdiv(n, 2), 16))
    grid = _cdiv(n, tile)

    scale = 1.0 / math.sqrt(float(num_scalars))        # e3nn path normalization

    kernel = functools.partial(_scalar_readout_kernel, scale=scale)
    return pl.pallas_call(
        kernel,
        out_shape=jax.ShapeDtypeStruct((n, out_dim), jnp.float32),
        grid_spec=pltpu.PrefetchScalarGridSpec(
            num_scalar_prefetch=0,
            grid=(grid,),
            in_specs=[
                pl.BlockSpec((tile, d), lambda i: (i, 0)),
                pl.BlockSpec((d, out_dim), lambda i: (0, 0)),
            ],
            out_specs=pl.BlockSpec((tile, out_dim), lambda i: (i, 0)),
        ),
        compiler_params=pltpu.CompilerParams(
            dimension_semantics=("parallel",),
            vmem_limit_bytes=32 * 1024 * 1024),   # tiles use <6 MiB even at 8192
    )(node_feats, w)


# -----------------------------------------------------------------------------
# EdgeEmbedding (bessel basis, cutoff=True), lane-dense basis-major output.
# -----------------------------------------------------------------------------
def _edge_embedding_kernel(dist_ref, out_ref, *, num_basis, start, end):
    # dist_ref: (1, TE) edge lengths; out_ref: (num_basis, TE) basis-major.
    c = end - start
    x = dist_ref[...] - start                          # (1, TE)
    u = x * (1.0 / c)
    mask = (x > 0.0) & (u < 1.0)                       # bessel cutoff

    # 1/x: approx reciprocal on the EUP + one Newton-Raphson VPU refinement.
    # Scalar constants folded in; masked lanes forced to exactly 0 so the
    # masked product below stays NaN-free for in-range lanes.
    safe_x = jnp.where(x > 0.0, x, 1.0)
    inv = pl.reciprocal(safe_x, approx=True)
    inv = inv * (2.0 - safe_x * inv)                   # rel. err ~1e-9
    prefactor = math.sqrt(2.0 / c) * math.sqrt(float(num_basis))
    scaled_inv = jnp.where(mask, prefactor * inv, 0.0)

    # sin(b*pi*u) for b = 1..NB via a coupled sin/cos rotation recurrence:
    #   s_{b+1} = s_b + (beta*c_b - alpha*s_b)   = sin((b+1)t)
    #   c_{b+1} = c_b - (alpha*c_b + beta*s_b)   = cos((b+1)t)
    # with alpha = 2*sin^2(t/2), beta = sin(t).  Only 2 transcendentals per
    # edge instead of NB (the EUP was the saturating unit); using alpha
    # (rather than the rounded 1 - cos t) keeps the phase increment at full
    # relative precision, so error stays at the few-eps level per basis row.
    half = (0.5 * math.pi) * u
    sh = jnp.sin(half)
    ch = jnp.cos(half)
    beta = 2.0 * sh * ch                               # sin(t)
    alpha = 2.0 * sh * sh                              # 1 - cos(t), full rel. prec.
    s = beta                                           # sin(1*t)
    co = 1.0 - alpha                                   # cos(1*t)
    for b in range(num_basis):                         # static unroll
        out_ref[pl.ds(b, 1), :] = s * scaled_inv
        if b + 1 < num_basis:
            ds = beta * co - alpha * s
            dc = alpha * co + beta * s
            s = s + ds
            co = co - dc


def edge_embedding(distances, num_basis, radius_cutoff=6.0, start=0.0,
                   *, edge_tile=32768):
    """distances: (E,) -> (num_basis, E) float32 bessel embedding.

    NOTE: the output is basis-major (num_basis, E) so that no transpose is
    needed on either side of the kernel (the old `.T` was an XLA pass as
    expensive as the kernel).  Downstream consumers should contract over the
    trailing edge axis, or transpose lazily where XLA can fuse it.
    """
    e = distances.shape[0]
    if e <= 128:
        tile = e                                       # single full-extent block
    else:
        # >= 2 grid steps (v7x has 2 TCs); lane tiles are multiples of 128.
        tile = min(edge_tile, _round_up(_cdiv(e, 2), 128))
    grid = _cdiv(e, tile)

    d2 = distances.astype(jnp.float32).reshape(1, e)   # no padding of E

    kernel = functools.partial(_edge_embedding_kernel, num_basis=num_basis,
                               start=start, end=radius_cutoff)
    return pl.pallas_call(
        kernel,
        out_shape=jax.ShapeDtypeStruct((num_basis, e), jnp.float32),
        grid_spec=pltpu.PrefetchScalarGridSpec(
            num_scalar_prefetch=0,
            grid=(grid,),
            in_specs=[pl.BlockSpec((1, tile), lambda i: (0, i))],
            out_specs=pl.BlockSpec((num_basis, tile), lambda i: (0, i)),
        ),
        compiler_params=pltpu.CompilerParams(
            dimension_semantics=("parallel",),
            vmem_limit_bytes=32 * 1024 * 1024),
    )(d2)


# -----------------------------------------------------------------------------
# Pure-JAX references.
# -----------------------------------------------------------------------------
def _readout_reference(node_feats, weight, num_scalars):
    return (node_feats[:, :num_scalars] @ weight) / math.sqrt(float(num_scalars))


def _edge_embedding_reference(distances, num_basis, radius_cutoff=6.0, start=0.0):
    x = distances[..., None] - start
    c = radius_cutoff - start
    roots = jnp.arange(1, num_basis + 1, dtype=jnp.float32) * math.pi
    out = math.sqrt(2.0 / c) * jnp.sin(roots * x / c) / jnp.where(x > 0, x, 1.0)
    out = out * (x / c < 1.0) * (x > 0.0)
    return out * math.sqrt(float(num_basis))           # (E, num_basis)


if __name__ == "__main__":
    key = jax.random.PRNGKey(0)
    k1, k2, k3 = jax.random.split(key, 3)

    # --- ScalarReadoutLayer ---------------------------------------------------
    # hidden_irreps ~ "32x0e + 16x1o + 8x2e"  ->  D = 32 + 48 + 40 = 120
    num_nodes, num_scalars, hidden_dim, output_dim = 64, 32, 120, 8
    # bf16 features/weights per review (halves HBM reads, MXU-native);
    # accumulation stays f32 inside the kernel.
    node_feats = jax.random.normal(
        k1, (num_nodes, hidden_dim), jnp.float32).astype(jnp.bfloat16)
    weight = jax.random.normal(
        k2, (num_scalars, output_dim), jnp.float32).astype(jnp.bfloat16)

    out = jax.block_until_ready(scalar_readout(node_feats, weight, num_scalars))
    ref = _readout_reference(node_feats.astype(jnp.float32),
                             weight.astype(jnp.float32), num_scalars)
    assert out.shape == (num_nodes, output_dim)
    assert out.dtype == jnp.float32
    assert jnp.allclose(out, ref, atol=1e-4, rtol=1e-4), "readout mismatch"

    # --- EdgeEmbedding (basis-major output, no transpose) ---------------------
    num_edges, num_basis, radius_cutoff = 300, 16, 6.0
    distances = jax.random.uniform(k3, (num_edges,), jnp.float32,
                                   minval=0.1, maxval=8.0)
    emb = jax.block_until_ready(edge_embedding(distances, num_basis, radius_cutoff))
    emb_ref = _edge_embedding_reference(distances, num_basis, radius_cutoff)
    assert emb.shape == (num_basis, num_edges)
    # f32 recurrence + approx-rcp error budget: a few 1e-5 absolute at the
    # 1/x-amplified small-distance end (outputs reach ~20), hence 1e-4 tols.
    assert jnp.allclose(emb, emb_ref.T, atol=1e-4, rtol=1e-4), "embedding mismatch"

    print("KERNEL_OK")
</pallas_src>

<mosaic_0001>
module attributes {stable_mosaic.version = 11 : i64} {
  func.func @_scalar_readout_kernel(%arg0: i32, %arg1: memref<32x120xbf16, #tpu.memory_space<vmem>>, %arg2: memref<120x8xbf16, #tpu.memory_space<vmem>>, %arg3: memref<32x8xf32, #tpu.memory_space<vmem>>) attributes {dimension_semantics = [#tpu.dimension_semantics<parallel>], iteration_bounds = array<i64: 2>, scalar_prefetch = 0 : i64, scratch_operands = 0 : i64, tpu.core_type = #tpu.core_type<tc>, window_params = [{transform_indices = @transform_0, window_bounds = array<i64: 32, 120>}, {pipeline_mode = #tpu.pipeline_mode<synchronous>, transform_indices = @transform_1, window_bounds = array<i64: 120, 8>}, {transform_indices = @transform_2, window_bounds = array<i64: 32, 8>}]} {
    %c0 = arith.constant 0 : index
    %c0_0 = arith.constant 0 : index
    %0 = vector.load %arg1[%c0, %c0_0] : memref<32x120xbf16, #tpu.memory_space<vmem>>, vector<32x120xbf16>
    %c0_1 = arith.constant 0 : index
    %c0_2 = arith.constant 0 : index
    %1 = vector.load %arg2[%c0_1, %c0_2] : memref<120x8xbf16, #tpu.memory_space<vmem>>, vector<120x8xbf16>
    %cst = arith.constant dense<0.000000e+00> : vector<32x8xf32>
    %2 = tpu.matmul %0, %1, %cst {dimension_numbers = #tpu.dot_dimension_numbers<[1], [0], [0], [1], [0, 0, 1, 1], [], []>} : vector<32x120xbf16>, vector<120x8xbf16>, vector<32x8xf32> -> vector<32x8xf32>
    %cst_3 = arith.constant 0.176776692 : f32
    %3 = vector.broadcast %cst_3 : f32 to vector<32x8xf32>
    %4 = arith.mulf %2, %3 : vector<32x8xf32>
    %c0_4 = arith.constant 0 : index
    %c0_5 = arith.constant 0 : index
    %5 = vector.load %arg3[%c0_4, %c0_5] : memref<32x8xf32, #tpu.memory_space<vmem>>, vector<32x8xf32>
    tpu.vector_store %arg3[%c0_4, %c0_5], %4 {strides = array<i32>} : memref<32x8xf32, #tpu.memory_space<vmem>>, vector<32x8xf32>,
    return
  }
  func.func @transform_0(%arg0: i32) -> (i32, i32) {
    %c0_i32 = arith.constant 0 : i32
    %c0_i32_0 = arith.constant 0 : i32
    return %arg0, %c0_i32 : i32, i32
  }
  func.func @transform_1(%arg0: i32) -> (i32, i32) {
    %c0_i32 = arith.constant 0 : i32
    %c0_i32_0 = arith.constant 0 : i32
    %c0_i32_1 = arith.constant 0 : i32
    return %c0_i32, %c0_i32_0 : i32, i32
  }
  func.func @transform_2(%arg0: i32) -> (i32, i32) {
    %c0_i32 = arith.constant 0 : i32
    %c0_i32_0 = arith.constant 0 : i32
    return %arg0, %c0_i32 : i32, i32
  }
}

</mosaic_0001>

<llo_original>
// kernel: tpu_custom_call.1
$region0: #{tpu_custom_call.1}
  #allocation0 [shape = 'u32[]', space=smem, size = 0x4, offset = 0x4, fixed_abs, tag = 'smem constant byte address 0x4 - core index']
  #allocation1 [shape = 'u32[144,128]{1,0:T(1,128)}', space=vmem, size = 0x12000, scoped, tag = 'internal scratch']
  %s0 = inlined_call_operand.vmem [shape: bf16[64,120], index: 0, kind: input, shape index: {}]
  %s1 = inlined_call_operand.vmem [shape: bf16[120,8], index: 1, kind: input, shape index: {}]
  %s2 = inlined_call_operand.vmem [shape: f32[64,8], index: 2, kind: output, shape index: {}]
  %s3 = sld [smem:[#allocation0]]
  $region41: #{tpu_custom_call.1} parent=0
    _
  %s5 = ssub.s32 1, %s3
  %s6 = scalar_select 0, %s5, %s3
  loop: start=0, step=1, limit=4
  $region2: #{tpu_custom_call.1} parent=0 // loop_pre_header
    _
  $region3: #{tpu_custom_call.1} parent=0 // loop_header
    %s8 = sphi 0, %s12
    %p9 = scmp.ge.s32.totalorder %s8, 4
    %s18 = sphi 0, %s20
    %s21 = sphi 0, %s18
    %s22 = sphi 0, %s21
    %s38 = sphi 0, %s22
    %s42 = sphi 0, %s42
    %s44 = sphi 0, %s42
    %s45 = sphi 0, %s44
    %s59 = sphi 0, %s45
    %s65 = sphi 0, %s67
    %s68 = sphi 0, %s65
    %s69 = sphi 0, %s68
    %s85 = sphi 0, %s69
  $region4: #{tpu_custom_call.1} parent=0 // loop_header_branch
    %11 = sbr.rel (%p9) target = $region8
  $region5: #{tpu_custom_call.1} parent=0 // loop_body
    %s13 = ssub.s32 %s8, 1
    %s14 = ssub.s32 %s8, 2
    %s15 = sadd.s32 %s8, 1
    %s16 = ssub.s32 %s8, %s15
    %p17 = scmp.eq.s32.totalorder %s16, 0
    %s19 = sadd.s32 %s18, 1
    %s20 = scalar_select %p17, %s18, %s19
    %p23 = pneg %p17
    %p24 = scmp.eq.s32.totalorder %s8, 1
    %p25 = por %p23, %p24
    %p26 = scmp.ne.s32.totalorder %s18, %s21
    %p27 = scmp.eq.s32.totalorder %s8, 0
    %p28 = por %p26, %p27
    %p29 = scmp.ne.s32.totalorder %s18, %s21
    %p30 = scmp.eq.s32.totalorder %s13, 1
    %p31 = por %p29, %p30
    %p32 = scmp.ne.s32.totalorder %s21, %s22
    %p33 = scmp.eq.s32.totalorder %s13, 0
    %p34 = por %p32, %p33
    %p35 = scmp.ne.s32.totalorder %s21, %s22
    %p36 = scmp.eq.s32.totalorder %s14, 1
    %p37 = por %p35, %p36
    %p39 = scmp.ne.s32.totalorder %s22, %s38
    %p40 = scmp.eq.s32.totalorder %s14, 0
    %p41 = por %p39, %p40
    %s43 = sadd.s32 %s42, 1
    %p46 = scmp.eq.s32.totalorder %s8, 1
    %p47 = scmp.ne.s32.totalorder %s42, %s44
    %p48 = scmp.eq.s32.totalorder %s8, 0
    %p49 = por %p47, %p48
    %p50 = scmp.ne.s32.totalorder %s42, %s44
    %p51 = scmp.eq.s32.totalorder %s13, 1
    %p52 = por %p50, %p51
    %p53 = scmp.ne.s32.totalorder %s44, %s45
    %p54 = scmp.eq.s32.totalorder %s13, 0
    %p55 = por %p53, %p54
    %p56 = scmp.ne.s32.totalorder %s44, %s45
    %p57 = scmp.eq.s32.totalorder %s14, 1
    %p58 = por %p56, %p57
    %p60 = scmp.ne.s32.totalorder %s45, %s59
    %p61 = scmp.eq.s32.totalorder %s14, 0
    %p62 = por %p60, %p61
    %s63 = ssub.s32 %s8, %s15
    %p64 = scmp.eq.s32.totalorder %s63, 0
    %s66 = sadd.s32 %s65, 1
    %s67 = scalar_select %p64, %s65, %s66
    %p70 = pneg %p64
    %p71 = scmp.eq.s32.totalorder %s8, 1
    %p72 = por %p70, %p71
    %p73 = scmp.ne.s32.totalorder %s65, %s68
    %p74 = scmp.eq.s32.totalorder %s8, 0
    %p75 = por %p73, %p74
    %p76 = scmp.ne.s32.totalorder %s65, %s68
    %p77 = scmp.eq.s32.totalorder %s13, 1
    %p78 = por %p76, %p77
    %p79 = scmp.ne.s32.totalorder %s68, %s69
    %p80 = scmp.eq.s32.totalorder %s13, 0
    %p81 = por %p79, %p80
    %p82 = scmp.ne.s32.totalorder %s68, %s69
    %p83 = scmp.eq.s32.totalorder %s14, 1
    %p84 = por %p82, %p83
    %p86 = scmp.ne.s32.totalorder %s69, %s85
    %p87 = scmp.eq.s32.totalorder %s14, 0
    %p88 = por %p86, %p87
    %p89 = scmp.le.s32.totalorder 1, %s8
    %p90 = scmp.lt.s32.totalorder %s8, 3
    %p91 = pnand %p89, %p90
    %p92 = pneg %p91
    // Predicated region
    $region9: #{tpu_custom_call.1} parent=5 // pred_check
      _
    $region10: #{tpu_custom_call.1} parent=5 // pred_check_branch
      %94 = sbr.rel (%p91) target = $region12
    $region11: #{tpu_custom_call.1} parent=5 // pred_region
      %s95 = ssub.s32 %s8, 1
      // Predicated region
      $region13: #{tpu_custom_call.1} parent=11 // pred_check
        %p96 = pneg %p55
      $region14: #{tpu_custom_call.1} parent=11 // pred_check_branch
        %98 = sbr.rel (%p96) target = $region16
      $region15: #{tpu_custom_call.1} parent=11 // pred_region
        _
      $region16: #{tpu_custom_call.1} parent=11 // pred_fallthru
        _
    $region12: #{tpu_custom_call.1} parent=5 // pred_fallthru
      _
    %p99 = scmp.lt.s32.totalorder %s8, 2
    // Predicated region
    $region17: #{tpu_custom_call.1} parent=5 // pred_check
      %p100 = pneg %p99
    $region18: #{tpu_custom_call.1} parent=5 // pred_check_branch
      %102 = sbr.rel (%p100) target = $region20
    $region19: #{tpu_custom_call.1} parent=5 // pred_region
      // Predicated region
      $region21: #{tpu_custom_call.1} parent=19 // pred_check
        %p103 = pneg %p28
      $region22: #{tpu_custom_call.1} parent=19 // pred_check_branch
        %105 = sbr.rel (%p103) target = $region24
      $region23: #{tpu_custom_call.1} parent=19 // pred_region
        %s106 = smul.u32 4, %s8
        %p107 = scmp.lt.s32.totalorder %s106, 7
        %s108 = scalar_select %p107, %s106, 7
        %s109 = smul.addr %s108, 4
        %s110 = scalar_lea.vmem %s0, %s109
        %s111 = smul.u32 4, %s8
      $region24: #{tpu_custom_call.1} parent=19 // pred_fallthru
        _
    $region20: #{tpu_custom_call.1} parent=5 // pred_fallthru
      _
    %p112 = scmp.le.s32.totalorder 1, %s8
    %p113 = scmp.lt.s32.totalorder %s8, 3
    %p114 = pnand %p112, %p113
    %p115 = pneg %p114
    // Predicated region
    $region25: #{tpu_custom_call.1} parent=5 // pred_check
      _
    $region26: #{tpu_custom_call.1} parent=5 // pred_check_branch
      %117 = sbr.rel (%p114) target = $region28
    $region27: #{tpu_custom_call.1} parent=5 // pred_region
      %s118 = ssub.s32 %s8, 1
      %s119 = smul.u32 4, %s13
      %p120 = scmp.lt.s32.totalorder %s119, 7
      %s121 = scalar_select %p120, %s119, 7
      %s122 = smul.addr %s121, 4
      %s123 = scalar_lea.vmem %s0, %s122
      %p124 = pneg %p34
      %p125 = pneg %p31
      %p126 = pneg %p55
      %p127 = pneg %p52
      %p128 = pneg %p81
      %p129 = pneg %p78
      %s130 = smul.u32 4, %s13
      %p131 = scmp.lt.s32.totalorder %s130, 7
      %s132 = scalar_select %p131, %s130, 7
      %s133 = smul.addr %s132, 8
      %s134 = scalar_lea.vmem %s2, %s133
      %s135 = smul.u32 4, %s13
      %p136 = scmp.lt.s32.totalorder %s135, 7
      %s137 = scalar_select %p136, %s135, 7
      %s138 = smul.addr %s137, 4
      %s139 = scalar_lea.vmem %s0, %s138
      %s140 = smul.u32 4, %s13
      %s141 = smul.u32 4, %s13
      %p142 = scmp.lt.s32.totalorder %s141, 7
      %s143 = scalar_select %p142, %s141, 7
      %s144 = smul.addr %s143, 8
      %s145 = scalar_lea.vmem %s2, %s144
      %s146 = smul.u32 4, %s13
      %v148 = vld [vmem:[%s139] sm:$0xf]
      %v149 = vld [vmem:[%s139 + $0x4] sm:$0xf]
      %v150 = vld [vmem:[%s139 + $0x8] sm:$0xf]
      %v151 = vld [vmem:[%s139 + $0xc] sm:$0xf]
      %v152 = vld [vmem:[%s1] sm:$0xf]
      %v153 = vld [vmem:[%s1 + $0x4] sm:$0xf]
      %v154 = vld [vmem:[%s1 + $0x8] sm:$0xf]
      %v155 = vld [vmem:[%s1 + $0xc] sm:$0xf]
      %v156 = vld [vmem:[%s1 + $0x10] sm:$0xf]
      %v157 = vld [vmem:[%s1 + $0x14] sm:$0xf]
      %v158 = vld [vmem:[%s1 + $0x18] sm:$0xf]
      %v159 = vld [vmem:[%s1 + $0x1c] sm:$0xf]
      %v160 = vld [vmem:[%s1 + $0x20] sm:$0xf]
      %v161 = vld [vmem:[%s1 + $0x24] sm:$0xf]
      %v162 = vld [vmem:[%s1 + $0x28] sm:$0xf]
      %v163 = vld [vmem:[%s1 + $0x2c] sm:$0xf]
      %v164 = vld [vmem:[%s1 + $0x30] sm:$0xf]
      %v165 = vld [vmem:[%s1 + $0x34] sm:$0xf]
      %v166 = vld [vmem:[%s1 + $0x38] sm:$0xf]
      %v171 = vunpack.c.l.b16 %v148
      %v172 = vunpack.c.l.b16 %v149
      %v173 = vunpack.c.l.b16 %v150
      %v174 = vunpack.c.l.b16 %v151
      %v175 = vpack.c.b16 %v172, %v171
      %v176 = vpack.c.b16 %v174, %v173
      %v192 = vunpack.c.l.b16 %v152
      %v193 = vunpack.c.l.b16 %v153
      %v194 = vunpack.c.l.b16 %v154
      %v195 = vunpack.c.l.b16 %v155
      %v196 = vunpack.c.l.b16 %v156
      %v197 = vunpack.c.l.b16 %v157
      %v198 = vunpack.c.l.b16 %v158
      %v199 = vunpack.c.l.b16 %v159
      %v200 = vunpack.c.l.b16 %v160
      %v201 = vunpack.c.l.b16 %v161
      %v202 = vunpack.c.l.b16 %v162
      %v203 = vunpack.c.l.b16 %v163
      %v204 = vunpack.c.l.b16 %v164
      %v205 = vunpack.c.l.b16 %v165
      %v206 = vunpack.c.l.b16 %v166
      %v207 = vpack.c.b16 %v193, %v192
      %v208 = vpack.c.b16 %v195, %v194
      %v209 = vpack.c.b16 %v197, %v196
      %v210 = vpack.c.b16 %v199, %v198
      %v211 = vpack.c.b16 %v201, %v200
      %v212 = vpack.c.b16 %v203, %v202
      %v213 = vpack.c.b16 %v205, %v204
      %v214 = vpack.c.b16 %v206, %v206
      %vm222 = vcmask 982016
      %v224 = vsel %vm222, %v175, 0
      %v227 = vsel %vm222, %v176, 0
      %vm229 = vcmask 1043456
      %v231 = vsel %vm229, %v214, 0
      %233 = vmatprep.subr.bf16.mxu0 0
      %234 = vmatpush1.bf16.msra.mxu0 %v207
      %235 = vmatprep.subr.bf16.mxu0 0
      %236 = vmatpush1.bf16.msra.mxu0 %v208
      %237 = vmatprep.subr.bf16.mxu0 0
      %238 = vmatpush1.bf16.msra.mxu0 %v209
      %239 = vmatprep.subr.bf16.mxu0 0
      %240 = vmatpush1.bf16.msra.mxu0 %v210
      %241 = vmatprep.subr.bf16.mxu0 0
      %242 = vmatpush1.bf16.msra.mxu0 %v211
      %243 = vmatprep.subr.bf16.mxu0 0
      %244 = vmatpush1.bf16.msra.mxu0 %v212
      %245 = vmatprep.subr.bf16.mxu0 0
      %246 = vmatpush1.bf16.msra.mxu0 %v213
      %247 = vmatprep.subr.bf16.mxu0 0
      %248 = vmatpush1.bf16.msra.mxu0 %v231
      %249 = vmatprep.subr.bf16.mxu0 0
      %250 = vmatpush1.bf16.msra.mxu0 0
      %251 = vmatprep.subr.bf16.mxu0 0
      %252 = vmatpush1.bf16.msra.mxu0 0
      %253 = vmatprep.subr.bf16.mxu0 0
      %254 = vmatpush1.bf16.msra.mxu0 0
      %255 = vmatprep.subr.bf16.mxu0 0
      %256 = vmatpush1.bf16.msra.mxu0 0
      %257 = vmatprep.subr.bf16.mxu0 0
      %258 = vmatpush1.bf16.msra.mxu0 0
      %259 = vmatprep.subr.bf16.mxu0 0
      %260 = vmatpush1.bf16.msra.mxu0 0
      %261 = vmatprep.subr.bf16.mxu0 0
      %262 = vmatpush1.bf16.msra.mxu0 0
      %263 = vmatprep.subr.bf16.mxu0 0
      %264 = vmatpush1.bf16.msra.mxu0 0
      %265 = vmatprep.mubr.bf16.mxu0 0
      %266 = vmatmul.mubr.bf16.gmra.mrb[0].mxu0 %v224
      %v267 = vpop.f32.mrb[0].mxu0
      %v268 = vadd.f32 0.0, %v267
      %v269 = vpop.f32.mrb[0].mxu0
      %v270 = vpop.f32.mrb[0].mxu0
      %v271 = vadd.f32 0.0, %v270
      %v272 = vpop.f32.mrb[0].mxu0
      %273 = vmatprep.mubr.bf16.mxu0 0
      %274 = vmatmul.mubr.bf16.gmra.mrb[0].mxu0 %v227
      %v275 = vpop.f32.mrb[0].mxu0
      %v276 = vadd.f32 0.0, %v275
      %v277 = vpop.f32.mrb[0].mxu0
      %v278 = vpop.f32.mrb[0].mxu0
      %v279 = vadd.f32 0.0, %v278
      %v280 = vpop.f32.mrb[0].mxu0
      %281 = vdwg.mxu0
      %v282 = vmul.f32 %v268, 0.17677669
      %v283 = vmul.f32 %v271, 0.17677669
      %v284 = vmul.f32 %v276, 0.17677669
      %v285 = vmul.f32 %v279, 0.17677669
      %vm286 = vcmask 64512
      %287 = vst.msk [vmem:[%s145] sm:$0xff] %vm286, %v282
      %288 = vst.msk [vmem:[%s145 + $0x8] sm:$0xff] %vm286, %v283
      %289 = vst.msk [vmem:[%s145 + $0x10] sm:$0xff] %vm286, %v284
      %290 = vst.msk [vmem:[%s145 + $0x18] sm:$0xff] %vm286, %v285
      %s291 = smul.u32 4, %s13
      %p292 = scmp.lt.s32.totalorder %s291, 7
      %s293 = scalar_select %p292, %s291, 7
      %s294 = smul.addr %s293, 8
      %s295 = scalar_lea.vmem %s2, %s294
      // Predicated region
      $region29: #{tpu_custom_call.1} parent=27 // pred_check
        %p296 = pneg %p78
      $region30: #{tpu_custom_call.1} parent=27 // pred_check_branch
        %298 = sbr.rel (%p296) target = $region32
      $region31: #{tpu_custom_call.1} parent=27 // pred_region
        %s299 = smul.u32 4, %s13
      $region32: #{tpu_custom_call.1} parent=27 // pred_fallthru
        _
    $region28: #{tpu_custom_call.1} parent=5 // pred_fallthru
      _
    %p300 = scmp.le.s32.totalorder 2, %s8
    // Predicated region
    $region33: #{tpu_custom_call.1} parent=5 // pred_check
      %p301 = pneg %p300
    $region34: #{tpu_custom_call.1} parent=5 // pred_check_branch
      %303 = sbr.rel (%p301) target = $region36
    $region35: #{tpu_custom_call.1} parent=5 // pred_region
      %s304 = ssub.s32 %s8, 2
      // Predicated region
      $region37: #{tpu_custom_call.1} parent=35 // pred_check
        %p305 = pneg %p84
      $region38: #{tpu_custom_call.1} parent=35 // pred_check_branch
        %307 = sbr.rel (%p305) target = $region40
      $region39: #{tpu_custom_call.1} parent=35 // pred_region
        %s308 = smul.u32 4, %s14
        %p309 = scmp.lt.s32.totalorder %s308, 7
        %s310 = scalar_select %p309, %s308, 7
        %s311 = smul.addr %s310, 8
        %s312 = scalar_lea.vmem %s2, %s311
      $region40: #{tpu_custom_call.1} parent=35 // pred_fallthru
        _
    $region36: #{tpu_custom_call.1} parent=5 // pred_fallthru
      _
  $region6: #{tpu_custom_call.1} parent=0 // loop_footer
    %s12 = sadd.s32 1, %s8
  $region7: #{tpu_custom_call.1} parent=0 // loop_footer_branch
    %7 = sbr.rel target = $region3
  $region8: #{tpu_custom_call.1} parent=0 // loop_exit
    _

</llo_original>
